<compile_context>
chip_gen: v6e
topology: v6e:2x2x1
jax: 0.10.0
libtpu: 0.0.40
codegen_flags: <defaults>
</compile_context>

<pallas_src>
import functools

import jax
import jax.numpy as jnp
from jax.experimental import pallas as pl
from jax.experimental.pallas import tpu as pltpu


# --------------------------- fused forward kernel -----------------------------

def _fused_smile_kernel(x_ref, y_ref, *rest, n_x_layers, n_y_layers, clip, n):
    """rest = (w_x0, b_x0, ..., w_y0, b_y0, ..., mi_out_ref)."""
    param_refs = rest[:-1]
    mi_ref = rest[-1]
    x_param_refs = param_refs[: 2 * n_x_layers]
    y_param_refs = param_refs[2 * n_x_layers:]

    def mlp(h, prefs, n_layers):
        # Hidden layers: Linear + ReLU. Final layer: Linear only.
        for li in range(n_layers):
            w = prefs[2 * li][...]
            b = prefs[2 * li + 1][...]          # (1, dout) -> broadcasts over rows
            h = jnp.dot(h, w, preferred_element_type=jnp.float32) + b
            if li < n_layers - 1:
                h = jnp.maximum(h, 0.0)
        return h

    xe = mlp(x_ref[...], x_param_refs, n_x_layers)   # (n, c)
    ye = mlp(y_ref[...], y_param_refs, n_y_layers)   # (n, c)

    # Joint term: mean of matched-pair dots == mean(diag(xe @ ye.T)),
    # computed without materializing / masking the score matrix.
    diag_mean = jnp.sum(xe * ye) / jnp.float32(n)

    # Pairwise scores, contracting the last dims directly (no explicit ye.T).
    scores = jax.lax.dot_general(
        xe, ye, (((1,), (1,)), ((), ())),
        preferred_element_type=jnp.float32)          # (n, n), scores[i,j]=<xe_i, ye_j>

    clamped = jnp.clip(scores, -jnp.float32(clip), jnp.float32(clip))

    # Off-diagonal logsumexp (diagonal masked to -inf-like; clip keeps exp stable).
    row = jax.lax.broadcasted_iota(jnp.int32, (n, n), 0)
    col = jax.lax.broadcasted_iota(jnp.int32, (n, n), 1)
    off = jnp.where(row == col, jnp.float32(-1e30), clamped)
    m = jnp.max(off)
    lse = m + jnp.log(jnp.sum(jnp.exp(off - m)))
    z = lse - jnp.log(jnp.float32(n * (n - 1)))

    mi_ref[0, 0] = diag_mean - z


def general_smile_mi_forward(x, y, x_params, y_params, clip):
    """Fused forward: one pallas_call, everything resident in VMEM."""
    n = x.shape[0]
    flat_params = []
    for w, b in x_params:
        flat_params += [w, b]
    for w, b in y_params:
        flat_params += [w, b]

    kernel = functools.partial(
        _fused_smile_kernel,
        n_x_layers=len(x_params),
        n_y_layers=len(y_params),
        clip=float(clip),
        n=int(n),
    )

    n_inputs = 2 + len(flat_params)
    out = pl.pallas_call(
        kernel,
        out_shape=jax.ShapeDtypeStruct((1, 1), jnp.float32),
        in_specs=[pl.BlockSpec(memory_space=pltpu.MemorySpace.VMEM)] * n_inputs,
        out_specs=pl.BlockSpec(memory_space=pltpu.MemorySpace.SMEM),
    )(x, y, *flat_params)
    return out[0, 0]


# ------------------------------ parameter init --------------------------------

def init_mlp_params(key, in_dim, hidden_sizes, out_dim):
    """Deterministic PyTorch-Linear-style init: U(-1/sqrt(fan_in), 1/sqrt(fan_in))."""
    params = []
    dims = [in_dim] + list(hidden_sizes) + [out_dim]
    for i in range(len(dims) - 1):
        key, kw, kb = jax.random.split(key, 3)
        fan_in, fan_out = dims[i], dims[i + 1]
        bound = 1.0 / jnp.sqrt(jnp.float32(fan_in))
        w = jax.random.uniform(kw, (fan_in, fan_out), jnp.float32, -bound, bound)
        b = jax.random.uniform(kb, (1, fan_out), jnp.float32, -bound, bound)
        params.append((w, b))
    return params


# --------------------------- reference (pure JAX) ------------------------------

def _reference(x, y, x_params, y_params, clip):
    def enc(h, params):
        for li, (w, b) in enumerate(params):
            h = h @ w + b
            if li < len(params) - 1:
                h = jnp.maximum(h, 0.0)
        return h

    xe = enc(x, x_params)
    ye = enc(y, y_params)
    scores = xe @ ye.T
    n = scores.shape[0]
    diag_mean = jnp.mean(jnp.diag(scores))
    clamped = jnp.clip(scores, -clip, clip)
    off = clamped - jnp.diag(jnp.full((n,), jnp.inf))
    z = jax.nn.logsumexp(off) - jnp.log(n * (n - 1.0))
    return diag_mean - z


# ------------------------------------ main -------------------------------------

if __name__ == "__main__":
    # Module config (consistent with the PyTorch module's constructor args)
    x_dim, y_dim = 6, 10
    critic_output_size = 16
    x_hidden = [32, 32]
    y_hidden = [32]
    clip = 5.0
    batch = 8

    key = jax.random.PRNGKey(0)
    k_xp, k_yp, k_x, k_y = jax.random.split(key, 4)

    x_params = init_mlp_params(k_xp, x_dim, x_hidden, critic_output_size)
    y_params = init_mlp_params(k_yp, y_dim, y_hidden, critic_output_size)

    x = jax.random.normal(k_x, (batch, x_dim), jnp.float32)
    y = jax.random.normal(k_y, (batch, y_dim), jnp.float32)

    mi = general_smile_mi_forward(x, y, x_params, y_params, clip)
    mi = jax.block_until_ready(mi)

    mi_ref = _reference(x, y, x_params, y_params, clip)
    assert jnp.allclose(mi, mi_ref, atol=1e-4, rtol=1e-4), (mi, mi_ref)

    print("KERNEL_OK")
</pallas_src>

<mosaic_0001>
module attributes {stable_mosaic.version = 11 : i64} {
  func.func @_fused_smile_kernel(%arg0: memref<8x6xf32, #tpu.memory_space<vmem>>, %arg1: memref<8x10xf32, #tpu.memory_space<vmem>>, %arg2: memref<6x32xf32, #tpu.memory_space<vmem>>, %arg3: memref<1x32xf32, #tpu.memory_space<vmem>>, %arg4: memref<32x32xf32, #tpu.memory_space<vmem>>, %arg5: memref<1x32xf32, #tpu.memory_space<vmem>>, %arg6: memref<32x16xf32, #tpu.memory_space<vmem>>, %arg7: memref<1x16xf32, #tpu.memory_space<vmem>>, %arg8: memref<10x32xf32, #tpu.memory_space<vmem>>, %arg9: memref<1x32xf32, #tpu.memory_space<vmem>>, %arg10: memref<32x16xf32, #tpu.memory_space<vmem>>, %arg11: memref<1x16xf32, #tpu.memory_space<vmem>>, %arg12: memref<1x1xf32, #tpu.memory_space<smem>>) attributes {dimension_semantics = [], scalar_prefetch = 0 : i64, scratch_operands = 0 : i64, tpu.core_type = #tpu.core_type<tc>} {
    %c0 = arith.constant 0 : index
    %c0_0 = arith.constant 0 : index
    %0 = vector.load %arg0[%c0, %c0_0] : memref<8x6xf32, #tpu.memory_space<vmem>>, vector<8x6xf32>
    %c0_1 = arith.constant 0 : index
    %c0_2 = arith.constant 0 : index
    %1 = vector.load %arg2[%c0_1, %c0_2] : memref<6x32xf32, #tpu.memory_space<vmem>>, vector<6x32xf32>
    %c0_3 = arith.constant 0 : index
    %c0_4 = arith.constant 0 : index
    %2 = vector.load %arg3[%c0_3, %c0_4] : memref<1x32xf32, #tpu.memory_space<vmem>>, vector<1x32xf32>
    %cst = arith.constant dense<0.000000e+00> : vector<8x32xf32>
    %3 = tpu.matmul %0, %1, %cst {dimension_numbers = #tpu.dot_dimension_numbers<[1], [0], [0], [1], [0, 0, 1, 1], [], []>} : vector<8x6xf32>, vector<6x32xf32>, vector<8x32xf32> -> vector<8x32xf32>
    %4 = vector.broadcast %2 : vector<1x32xf32> to vector<8x32xf32>
    %5 = arith.addf %3, %4 : vector<8x32xf32>
    %cst_5 = arith.constant 0.000000e+00 : f32
    %6 = vector.broadcast %cst_5 : f32 to vector<8x32xf32>
    %7 = arith.maximumf %5, %6 : vector<8x32xf32>
    %c0_6 = arith.constant 0 : index
    %c0_7 = arith.constant 0 : index
    %8 = vector.load %arg4[%c0_6, %c0_7] : memref<32x32xf32, #tpu.memory_space<vmem>>, vector<32x32xf32>
    %c0_8 = arith.constant 0 : index
    %c0_9 = arith.constant 0 : index
    %9 = vector.load %arg5[%c0_8, %c0_9] : memref<1x32xf32, #tpu.memory_space<vmem>>, vector<1x32xf32>
    %cst_10 = arith.constant dense<0.000000e+00> : vector<8x32xf32>
    %10 = tpu.matmul %7, %8, %cst_10 {dimension_numbers = #tpu.dot_dimension_numbers<[1], [0], [0], [1], [0, 0, 1, 1], [], []>} : vector<8x32xf32>, vector<32x32xf32>, vector<8x32xf32> -> vector<8x32xf32>
    %11 = vector.broadcast %9 : vector<1x32xf32> to vector<8x32xf32>
    %12 = arith.addf %10, %11 : vector<8x32xf32>
    %cst_11 = arith.constant 0.000000e+00 : f32
    %13 = vector.broadcast %cst_11 : f32 to vector<8x32xf32>
    %14 = arith.maximumf %12, %13 : vector<8x32xf32>
    %c0_12 = arith.constant 0 : index
    %c0_13 = arith.constant 0 : index
    %15 = vector.load %arg6[%c0_12, %c0_13] : memref<32x16xf32, #tpu.memory_space<vmem>>, vector<32x16xf32>
    %c0_14 = arith.constant 0 : index
    %c0_15 = arith.constant 0 : index
    %16 = vector.load %arg7[%c0_14, %c0_15] : memref<1x16xf32, #tpu.memory_space<vmem>>, vector<1x16xf32>
    %cst_16 = arith.constant dense<0.000000e+00> : vector<8x16xf32>
    %17 = tpu.matmul %14, %15, %cst_16 {dimension_numbers = #tpu.dot_dimension_numbers<[1], [0], [0], [1], [0, 0, 1, 1], [], []>} : vector<8x32xf32>, vector<32x16xf32>, vector<8x16xf32> -> vector<8x16xf32>
    %18 = vector.broadcast %16 : vector<1x16xf32> to vector<8x16xf32>
    %19 = arith.addf %17, %18 : vector<8x16xf32>
    %c0_17 = arith.constant 0 : index
    %c0_18 = arith.constant 0 : index
    %20 = vector.load %arg1[%c0_17, %c0_18] : memref<8x10xf32, #tpu.memory_space<vmem>>, vector<8x10xf32>
    %c0_19 = arith.constant 0 : index
    %c0_20 = arith.constant 0 : index
    %21 = vector.load %arg8[%c0_19, %c0_20] : memref<10x32xf32, #tpu.memory_space<vmem>>, vector<10x32xf32>
    %c0_21 = arith.constant 0 : index
    %c0_22 = arith.constant 0 : index
    %22 = vector.load %arg9[%c0_21, %c0_22] : memref<1x32xf32, #tpu.memory_space<vmem>>, vector<1x32xf32>
    %cst_23 = arith.constant dense<0.000000e+00> : vector<8x32xf32>
    %23 = tpu.matmul %20, %21, %cst_23 {dimension_numbers = #tpu.dot_dimension_numbers<[1], [0], [0], [1], [0, 0, 1, 1], [], []>} : vector<8x10xf32>, vector<10x32xf32>, vector<8x32xf32> -> vector<8x32xf32>
    %24 = vector.broadcast %22 : vector<1x32xf32> to vector<8x32xf32>
    %25 = arith.addf %23, %24 : vector<8x32xf32>
    %cst_24 = arith.constant 0.000000e+00 : f32
    %26 = vector.broadcast %cst_24 : f32 to vector<8x32xf32>
    %27 = arith.maximumf %25, %26 : vector<8x32xf32>
    %c0_25 = arith.constant 0 : index
    %c0_26 = arith.constant 0 : index
    %28 = vector.load %arg10[%c0_25, %c0_26] : memref<32x16xf32, #tpu.memory_space<vmem>>, vector<32x16xf32>
    %c0_27 = arith.constant 0 : index
    %c0_28 = arith.constant 0 : index
    %29 = vector.load %arg11[%c0_27, %c0_28] : memref<1x16xf32, #tpu.memory_space<vmem>>, vector<1x16xf32>
    %cst_29 = arith.constant dense<0.000000e+00> : vector<8x16xf32>
    %30 = tpu.matmul %27, %28, %cst_29 {dimension_numbers = #tpu.dot_dimension_numbers<[1], [0], [0], [1], [0, 0, 1, 1], [], []>} : vector<8x32xf32>, vector<32x16xf32>, vector<8x16xf32> -> vector<8x16xf32>
    %31 = vector.broadcast %29 : vector<1x16xf32> to vector<8x16xf32>
    %32 = arith.addf %30, %31 : vector<8x16xf32>
    %33 = arith.mulf %19, %32 : vector<8x16xf32>
    %34 = vector.shape_cast %33 : vector<8x16xf32> to vector<1x8x16xf32>
    %cst_30 = arith.constant dense<0.000000e+00> : vector<1xf32>
    %35 = vector.multi_reduction <add>, %34, %cst_30 [1, 2] : vector<1x8x16xf32> to vector<1xf32>
    %36 = vector.shape_cast %35 : vector<1xf32> to vector<1x1x1xf32>
    %37 = vector.extract %36[0, 0, 0] : f32 from vector<1x1x1xf32>
    %cst_31 = arith.constant 8.000000e+00 : f32
    %38 = arith.divf %37, %cst_31 : f32
    %cst_32 = arith.constant dense<0.000000e+00> : vector<8x8xf32>
    %39 = tpu.matmul %19, %32, %cst_32 {dimension_numbers = #tpu.dot_dimension_numbers<[1], [1], [0], [0], [0, 0, 1, 0], [], []>} : vector<8x16xf32>, vector<8x16xf32>, vector<8x8xf32> -> vector<8x8xf32>
    %cst_33 = arith.constant 0.000000e+00 : f32
    %cst_34 = arith.constant 5.000000e+00 : f32
    %40 = arith.subf %cst_33, %cst_34 : f32
    %cst_35 = arith.constant 5.000000e+00 : f32
    %41 = vector.broadcast %40 : f32 to vector<8x8xf32>
    %42 = arith.maximumf %41, %39 : vector<8x8xf32>
    %43 = vector.broadcast %cst_35 : f32 to vector<8x8xf32>
    %44 = arith.minimumf %43, %42 : vector<8x8xf32>
    %45 = tpu.iota {dimensions = array<i32: 0>} : vector<8x8xi32>
    %46 = tpu.iota {dimensions = array<i32: 1>} : vector<8x8xi32>
    %47 = arith.cmpi eq, %45, %46 : vector<8x8xi32>
    %cst_36 = arith.constant -1.000000e+30 : f32
    %48 = vector.broadcast %cst_36 : f32 to vector<8x8xf32>
    %49 = arith.select %47, %48, %44 : vector<8x8xi1>, vector<8x8xf32>
    %50 = vector.shape_cast %49 : vector<8x8xf32> to vector<1x8x8xf32>
    %cst_37 = arith.constant dense<0xFF800000> : vector<1xf32>
    %51 = vector.multi_reduction <maximumf>, %50, %cst_37 [1, 2] : vector<1x8x8xf32> to vector<1xf32>
    %52 = vector.shape_cast %51 : vector<1xf32> to vector<1x1x1xf32>
    %53 = vector.extract %52[0, 0, 0] : f32 from vector<1x1x1xf32>
    %54 = vector.broadcast %53 : f32 to vector<8x8xf32>
    %55 = arith.subf %49, %54 : vector<8x8xf32>
    %56 = math.exp %55 : vector<8x8xf32>
    %57 = vector.shape_cast %56 : vector<8x8xf32> to vector<1x8x8xf32>
    %cst_38 = arith.constant dense<0.000000e+00> : vector<1xf32>
    %58 = vector.multi_reduction <add>, %57, %cst_38 [1, 2] : vector<1x8x8xf32> to vector<1xf32>
    %59 = vector.shape_cast %58 : vector<1xf32> to vector<1x1x1xf32>
    %60 = vector.extract %59[0, 0, 0] : f32 from vector<1x1x1xf32>
    %61 = math.log %60 : f32
    %62 = arith.addf %53, %61 : f32
    %cst_39 = arith.constant 5.600000e+01 : f32
    %63 = math.log %cst_39 : f32
    %64 = arith.subf %62, %63 : f32
    %65 = arith.subf %38, %64 : f32
    %c0_40 = arith.constant 0 : index
    %c0_41 = arith.constant 0 : index
    %66 = memref.load %arg12[%c0_40, %c0_41] : memref<1x1xf32, #tpu.memory_space<smem>>
    memref.store %65, %arg12[%c0_40, %c0_41] : memref<1x1xf32, #tpu.memory_space<smem>>
    return
  }
}

</mosaic_0001>

<llo_original>
// kernel: tpu_custom_call.1
$region0: #{tpu_custom_call.1}
  #allocation0 [shape = 'u32[]', space=smem, size = 0x4, offset = 0x4, fixed_abs, tag = 'smem constant byte address 0x4 - core index']
  #allocation1 [shape = 'u32[144,128]{1,0:T(1,128)}', space=vmem, size = 0x12000, scoped, tag = 'internal scratch']
  %s0 = inlined_call_operand.vmem [shape: f32[8,6], index: 0, kind: input, shape index: {}]
  %s1 = inlined_call_operand.vmem [shape: f32[8,10], index: 1, kind: input, shape index: {}]
  %s2 = inlined_call_operand.vmem [shape: f32[6,32], index: 2, kind: input, shape index: {}]
  %s3 = inlined_call_operand.vmem [shape: f32[1,32], index: 3, kind: input, shape index: {}]
  %s4 = inlined_call_operand.vmem [shape: f32[32,32], index: 4, kind: input, shape index: {}]
  %s5 = inlined_call_operand.vmem [shape: f32[1,32], index: 5, kind: input, shape index: {}]
  %s6 = inlined_call_operand.vmem [shape: f32[32,16], index: 6, kind: input, shape index: {}]
  %s7 = inlined_call_operand.vmem [shape: f32[1,16], index: 7, kind: input, shape index: {}]
  %s8 = inlined_call_operand.vmem [shape: f32[10,32], index: 8, kind: input, shape index: {}]
  %s9 = inlined_call_operand.vmem [shape: f32[1,32], index: 9, kind: input, shape index: {}]
  %s10 = inlined_call_operand.vmem [shape: f32[32,16], index: 10, kind: input, shape index: {}]
  %s11 = inlined_call_operand.vmem [shape: f32[1,16], index: 11, kind: input, shape index: {}]
  %s12 = inlined_call_operand.hbm [shape: f32[1,1], index: 12, kind: output, shape index: {}]
  %s13 = sld [smem:[#allocation0]]
  $region58: #{tpu_custom_call.1} parent=0
    _
  %s15 = ssub.s32 1, %s13
  %s16 = scalar_select 0, %s15, %s13
  $region1: #{tpu_custom_call.1} parent=0
    #allocation2 [shape = 'u8[512]{0}', space=smem, size = 0x200, scoped, tag = 'output window, operand 0, single buffered']
    #allocation3 [shape = 's32[1]{0}', space=sflag, size = 0x4, scoped, tag = 'scoped memory for tpu_custom_call.1']
    %17 = vsyncpa [#allocation3], 0
    // Predicated region
    $region2: #{tpu_custom_call.1} parent=1 // pred_check
      _
    $region3: #{tpu_custom_call.1} parent=1 // pred_check_branch
      %19 = sbr.rel (0) target = $region5
    $region4: #{tpu_custom_call.1} parent=1 // pred_region
      _
    $region5: #{tpu_custom_call.1} parent=1 // pred_fallthru
      _
    // Predicated region
    $region6: #{tpu_custom_call.1} parent=1 // pred_check
      _
    $region7: #{tpu_custom_call.1} parent=1 // pred_check_branch
      %21 = sbr.rel (0) target = $region9
    $region8: #{tpu_custom_call.1} parent=1 // pred_region
      _
    $region9: #{tpu_custom_call.1} parent=1 // pred_fallthru
      _
    // Predicated region
    $region10: #{tpu_custom_call.1} parent=1 // pred_check
      _
    $region11: #{tpu_custom_call.1} parent=1 // pred_check_branch
      %23 = sbr.rel (0) target = $region13
    $region12: #{tpu_custom_call.1} parent=1 // pred_region
      _
    $region13: #{tpu_custom_call.1} parent=1 // pred_fallthru
      _
    // Predicated region
    $region14: #{tpu_custom_call.1} parent=1 // pred_check
      _
    $region15: #{tpu_custom_call.1} parent=1 // pred_check_branch
      %25 = sbr.rel (0) target = $region17
    $region16: #{tpu_custom_call.1} parent=1 // pred_region
      _
    $region17: #{tpu_custom_call.1} parent=1 // pred_fallthru
      _
    // Predicated region
    $region18: #{tpu_custom_call.1} parent=1 // pred_check
      _
    $region19: #{tpu_custom_call.1} parent=1 // pred_check_branch
      %27 = sbr.rel (0) target = $region21
    $region20: #{tpu_custom_call.1} parent=1 // pred_region
      _
    $region21: #{tpu_custom_call.1} parent=1 // pred_fallthru
      _
    // Predicated region
    $region22: #{tpu_custom_call.1} parent=1 // pred_check
      _
    $region23: #{tpu_custom_call.1} parent=1 // pred_check_branch
      %29 = sbr.rel (0) target = $region25
    $region24: #{tpu_custom_call.1} parent=1 // pred_region
      _
    $region25: #{tpu_custom_call.1} parent=1 // pred_fallthru
      _
    // Predicated region
    $region26: #{tpu_custom_call.1} parent=1 // pred_check
      _
    $region27: #{tpu_custom_call.1} parent=1 // pred_check_branch
      %31 = sbr.rel (0) target = $region29
    $region28: #{tpu_custom_call.1} parent=1 // pred_region
      _
    $region29: #{tpu_custom_call.1} parent=1 // pred_fallthru
      _
    // Predicated region
    $region30: #{tpu_custom_call.1} parent=1 // pred_check
      _
    $region31: #{tpu_custom_call.1} parent=1 // pred_check_branch
      %33 = sbr.rel (0) target = $region33
    $region32: #{tpu_custom_call.1} parent=1 // pred_region
      _
    $region33: #{tpu_custom_call.1} parent=1 // pred_fallthru
      _
    // Predicated region
    $region34: #{tpu_custom_call.1} parent=1 // pred_check
      _
    $region35: #{tpu_custom_call.1} parent=1 // pred_check_branch
      %35 = sbr.rel (0) target = $region37
    $region36: #{tpu_custom_call.1} parent=1 // pred_region
      _
    $region37: #{tpu_custom_call.1} parent=1 // pred_fallthru
      _
    // Predicated region
    $region38: #{tpu_custom_call.1} parent=1 // pred_check
      _
    $region39: #{tpu_custom_call.1} parent=1 // pred_check_branch
      %37 = sbr.rel (0) target = $region41
    $region40: #{tpu_custom_call.1} parent=1 // pred_region
      _
    $region41: #{tpu_custom_call.1} parent=1 // pred_fallthru
      _
    // Predicated region
    $region42: #{tpu_custom_call.1} parent=1 // pred_check
      _
    $region43: #{tpu_custom_call.1} parent=1 // pred_check_branch
      %39 = sbr.rel (0) target = $region45
    $region44: #{tpu_custom_call.1} parent=1 // pred_region
      _
    $region45: #{tpu_custom_call.1} parent=1 // pred_fallthru
      _
    // Predicated region
    $region46: #{tpu_custom_call.1} parent=1 // pred_check
      _
    $region47: #{tpu_custom_call.1} parent=1 // pred_check_branch
      %41 = sbr.rel (0) target = $region49
    $region48: #{tpu_custom_call.1} parent=1 // pred_region
      _
    $region49: #{tpu_custom_call.1} parent=1 // pred_fallthru
      _
    %v42 = vld [vmem:[%s0] sm:$0xff]
    %v43 = vld [vmem:[%s2] sm:$0x3f]
    %v44 = vld [vmem:[%s3] sm:$0x1]
    %v46 = vlaneseq
    %v47 = vshrl.u32 %v46, 7
    %v48 = vsub.s32 0, %v47
    %v49 = vrot.slane %v44, %v48
    %vm51 = vcmask 48128
    %v53 = vsel %vm51, %v42, 0
    %vm55 = vcmask 1045504
    %v57 = vsel %vm55, %v43, 0
    %59 = vmatprep.subr.mxu0 0.0
    %60 = vmatpush1.msra.mxu0 0.0
    %61 = vmatprep.subr.mxu0 0.0
    %62 = vmatpush1.msra.mxu0 0.0
    %63 = vmatprep.subr.mxu0 0.0
    %64 = vmatpush1.msra.mxu0 0.0
    %65 = vmatprep.subr.mxu0 0.0
    %66 = vmatpush1.msra.mxu0 0.0
    %67 = vmatprep.subr.mxu0 0.0
    %68 = vmatpush1.msra.mxu0 0.0
    %69 = vmatprep.subr.mxu0 0.0
    %70 = vmatpush1.msra.mxu0 0.0
    %71 = vmatprep.subr.mxu0 0.0
    %72 = vmatpush1.msra.mxu0 0.0
    %73 = vmatprep.subr.mxu0 0.0
    %74 = vmatpush1.msra.mxu0 0.0
    %75 = vmatprep.subr.mxu0 0.0
    %76 = vmatpush1.msra.mxu0 0.0
    %77 = vmatprep.subr.mxu0 0.0
    %78 = vmatpush1.msra.mxu0 0.0
    %79 = vmatprep.subr.mxu0 0.0
    %80 = vmatpush1.msra.mxu0 0.0
    %81 = vmatprep.subr.mxu0 0.0
    %82 = vmatpush1.msra.mxu0 0.0
    %83 = vmatprep.subr.mxu0 0.0
    %84 = vmatpush1.msra.mxu0 0.0
    %85 = vmatprep.subr.mxu0 0.0
    %86 = vmatpush1.msra.mxu0 0.0
    %87 = vmatprep.subr.mxu0 0.0
    %88 = vmatpush1.msra.mxu0 0.0
    %89 = vmatprep.subr.mxu0 0.0
    %90 = vmatpush1.msra.mxu0 %v57
    %91 = vmatprep.subr.mxu0 0.0
    %92 = vmatpush2.msra.mxu0 0.0
    %93 = vmatprep.subr.mxu0 0.0
    %94 = vmatpush2.msra.mxu0 0.0
    %95 = vmatprep.subr.mxu0 0.0
    %96 = vmatpush2.msra.mxu0 0.0
    %97 = vmatprep.subr.mxu0 0.0
    %98 = vmatpush2.msra.mxu0 0.0
    %99 = vmatprep.subr.mxu0 0.0
    %100 = vmatpush2.msra.mxu0 0.0
    %101 = vmatprep.subr.mxu0 0.0
    %102 = vmatpush2.msra.mxu0 0.0
    %103 = vmatprep.subr.mxu0 0.0
    %104 = vmatpush2.msra.mxu0 0.0
    %105 = vmatprep.subr.mxu0 0.0
    %106 = vmatpush2.msra.mxu0 0.0
    %107 = vmatprep.subr.mxu0 0.0
    %108 = vmatpush2.msra.mxu0 0.0
    %109 = vmatprep.subr.mxu0 0.0
    %110 = vmatpush2.msra.mxu0 0.0
    %111 = vmatprep.subr.mxu0 0.0
    %112 = vmatpush2.msra.mxu0 0.0
    %113 = vmatprep.subr.mxu0 0.0
    %114 = vmatpush2.msra.mxu0 0.0
    %115 = vmatprep.subr.mxu0 0.0
    %116 = vmatpush2.msra.mxu0 0.0
    %117 = vmatprep.subr.mxu0 0.0
    %118 = vmatpush2.msra.mxu0 0.0
    %119 = vmatprep.subr.mxu0 0.0
    %120 = vmatpush2.msra.mxu0 0.0
    %121 = vmatprep.subr.mxu0 0.0
    %122 = vmatpush2.msra.mxu0 0.0
    %123 = vmatprep.mubr.f32.mxu0 0.0
    %124 = vmatmul.mubr.f32.gmra.mxu0 %v53
    %v125 = vpop.f32.mrf.mxu0
    %v126 = vadd.f32 %v49, %v125
    %v127 = vpop.f32.mrf.mxu0
    %128 = vdwg.mxu0
    %v129 = vmax.f32 %v126, 0.0
    %v130 = vld [vmem:[%s4] sm:$0xff]
    %v131 = vld [vmem:[%s4 + $0x8] sm:$0xff]
    %v132 = vld [vmem:[%s4 + $0x10] sm:$0xff]
    %v133 = vld [vmem:[%s4 + $0x18] sm:$0xff]
    %v134 = vld [vmem:[%s5] sm:$0x1]
    %v136 = vlaneseq
    %v137 = vshrl.u32 %v136, 7
    %v138 = vsub.s32 0, %v137
    %v139 = vrot.slane %v134, %v138
    %vm141 = vcmask 261120
    %v143 = vsel %vm141, %v129, 0
    %145 = vmatprep.subr.mxu0 0.0
    %146 = vmatpush1.msra.mxu0 0.0
    %147 = vmatprep.subr.mxu0 0.0
    %148 = vmatpush1.msra.mxu0 0.0
    %149 = vmatprep.subr.mxu0 0.0
    %150 = vmatpush1.msra.mxu0 0.0
    %151 = vmatprep.subr.mxu0 0.0
    %152 = vmatpush1.msra.mxu0 0.0
    %153 = vmatprep.subr.mxu0 0.0
    %154 = vmatpush1.msra.mxu0 0.0
    %155 = vmatprep.subr.mxu0 0.0
    %156 = vmatpush1.msra.mxu0 0.0
    %157 = vmatprep.subr.mxu0 0.0
    %158 = vmatpush1.msra.mxu0 0.0
    %159 = vmatprep.subr.mxu0 0.0
    %160 = vmatpush1.msra.mxu0 0.0
    %161 = vmatprep.subr.mxu0 0.0
    %162 = vmatpush1.msra.mxu0 0.0
    %163 = vmatprep.subr.mxu0 0.0
    %164 = vmatpush1.msra.mxu0 0.0
    %165 = vmatprep.subr.mxu0 0.0
    %166 = vmatpush1.msra.mxu0 0.0
    %167 = vmatprep.subr.mxu0 0.0
    %168 = vmatpush1.msra.mxu0 0.0
    %169 = vmatprep.subr.mxu0 0.0
    %170 = vmatpush1.msra.mxu0 %v133
    %171 = vmatprep.subr.mxu0 0.0
    %172 = vmatpush1.msra.mxu0 %v132
    %173 = vmatprep.subr.mxu0 0.0
    %174 = vmatpush1.msra.mxu0 %v131
    %175 = vmatprep.subr.mxu0 0.0
    %176 = vmatpush1.msra.mxu0 %v130
    %177 = vmatprep.subr.mxu0 0.0
    %178 = vmatpush2.msra.mxu0 0.0
    %179 = vmatprep.subr.mxu0 0.0
    %180 = vmatpush2.msra.mxu0 0.0
    %181 = vmatprep.subr.mxu0 0.0
    %182 = vmatpush2.msra.mxu0 0.0
    %183 = vmatprep.subr.mxu0 0.0
    %184 = vmatpush2.msra.mxu0 0.0
    %185 = vmatprep.subr.mxu0 0.0
    %186 = vmatpush2.msra.mxu0 0.0
    %187 = vmatprep.subr.mxu0 0.0
    %188 = vmatpush2.msra.mxu0 0.0
    %189 = vmatprep.subr.mxu0 0.0
    %190 = vmatpush2.msra.mxu0 0.0
    %191 = vmatprep.subr.mxu0 0.0
    %192 = vmatpush2.msra.mxu0 0.0
    %193 = vmatprep.subr.mxu0 0.0
    %194 = vmatpush2.msra.mxu0 0.0
    %195 = vmatprep.subr.mxu0 0.0
    %196 = vmatpush2.msra.mxu0 0.0
    %197 = vmatprep.subr.mxu0 0.0
    %198 = vmatpush2.msra.mxu0 0.0
    %199 = vmatprep.subr.mxu0 0.0
    %200 = vmatpush2.msra.mxu0 0.0
    %201 = vmatprep.subr.mxu0 0.0
    %202 = vmatpush2.msra.mxu0 0.0
    %203 = vmatprep.subr.mxu0 0.0
    %204 = vmatpush2.msra.mxu0 0.0
    %205 = vmatprep.subr.mxu0 0.0
    %206 = vmatpush2.msra.mxu0 0.0
    %207 = vmatprep.subr.mxu0 0.0
    %208 = vmatpush2.msra.mxu0 0.0
    %209 = vmatprep.mubr.f32.mxu0 0.0
    %210 = vmatmul.mubr.f32.gmra.mxu0 %v143
    %v211 = vpop.f32.mrf.mxu0
    %v212 = vadd.f32 %v139, %v211
    %v213 = vpop.f32.mrf.mxu0
    %214 = vdwg.mxu0
    %v215 = vmax.f32 %v212, 0.0
    %v216 = vld [vmem:[%s6] sm:$0xff]
    %v217 = vld [vmem:[%s6 + $0x8] sm:$0xff]
    %v218 = vld [vmem:[%s6 + $0x10] sm:$0xff]
    %v219 = vld [vmem:[%s6 + $0x18] sm:$0xff]
    %v220 = vld [vmem:[%s7] sm:$0x1]
    %v222 = vlaneseq
    %v223 = vshrl.u32 %v222, 7
    %v224 = vsub.s32 0, %v223
    %v225 = vrot.slane %v220, %v224
    %v228 = vsel %vm141, %v215, 0
    %230 = vmatprep.subr.mxu0 0.0
    %231 = vmatpush1.msra.mxu0 0.0
    %232 = vmatprep.subr.mxu0 0.0
    %233 = vmatpush1.msra.mxu0 0.0
    %234 = vmatprep.subr.mxu0 0.0
    %235 = vmatpush1.msra.mxu0 0.0
    %236 = vmatprep.subr.mxu0 0.0
    %237 = vmatpush1.msra.mxu0 0.0
    %238 = vmatprep.subr.mxu0 0.0
    %239 = vmatpush1.msra.mxu0 0.0
    %240 = vmatprep.subr.mxu0 0.0
    %241 = vmatpush1.msra.mxu0 0.0
    %242 = vmatprep.subr.mxu0 0.0
    %243 = vmatpush1.msra.mxu0 0.0
    %244 = vmatprep.subr.mxu0 0.0
    %245 = vmatpush1.msra.mxu0 0.0
    %246 = vmatprep.subr.mxu0 0.0
    %247 = vmatpush1.msra.mxu0 0.0
    %248 = vmatprep.subr.mxu0 0.0
    %249 = vmatpush1.msra.mxu0 0.0
    %250 = vmatprep.subr.mxu0 0.0
    %251 = vmatpush1.msra.mxu0 0.0
    %252 = vmatprep.subr.mxu0 0.0
    %253 = vmatpush1.msra.mxu0 0.0
    %254 = vmatprep.subr.mxu0 0.0
    %255 = vmatpush1.msra.mxu0 %v219
    %256 = vmatprep.subr.mxu0 0.0
    %257 = vmatpush1.msra.mxu0 %v218
    %258 = vmatprep.subr.mxu0 0.0
    %259 = vmatpush1.msra.mxu0 %v217
    %260 = vmatprep.subr.mxu0 0.0
    %261 = vmatpush1.msra.mxu0 %v216
    %262 = vmatprep.subr.mxu0 0.0
    %263 = vmatpush2.msra.mxu0 0.0
    %264 = vmatprep.subr.mxu0 0.0
    %265 = vmatpush2.msra.mxu0 0.0
    %266 = vmatprep.subr.mxu0 0.0
    %267 = vmatpush2.msra.mxu0 0.0
    %268 = vmatprep.subr.mxu0 0.0
    %269 = vmatpush2.msra.mxu0 0.0
    %270 = vmatprep.subr.mxu0 0.0
    %271 = vmatpush2.msra.mxu0 0.0
    %272 = vmatprep.subr.mxu0 0.0
    %273 = vmatpush2.msra.mxu0 0.0
    %274 = vmatprep.subr.mxu0 0.0
    %275 = vmatpush2.msra.mxu0 0.0
    %276 = vmatprep.subr.mxu0 0.0
    %277 = vmatpush2.msra.mxu0 0.0
    %278 = vmatprep.subr.mxu0 0.0
    %279 = vmatpush2.msra.mxu0 0.0
    %280 = vmatprep.subr.mxu0 0.0
    %281 = vmatpush2.msra.mxu0 0.0
    %282 = vmatprep.subr.mxu0 0.0
    %283 = vmatpush2.msra.mxu0 0.0
    %284 = vmatprep.subr.mxu0 0.0
    %285 = vmatpush2.msra.mxu0 0.0
    %286 = vmatprep.subr.mxu0 0.0
    %287 = vmatpush2.msra.mxu0 0.0
    %288 = vmatprep.subr.mxu0 0.0
    %289 = vmatpush2.msra.mxu0 0.0
    %290 = vmatprep.subr.mxu0 0.0
    %291 = vmatpush2.msra.mxu0 0.0
    %292 = vmatprep.subr.mxu0 0.0
    %293 = vmatpush2.msra.mxu0 0.0
    %294 = vmatprep.mubr.f32.mxu0 0.0
    %295 = vmatmul.mubr.f32.gmra.mxu0 %v228
    %v296 = vpop.f32.mrf.mxu0
    %v297 = vadd.f32 %v225, %v296
    %v298 = vpop.f32.mrf.mxu0
    %299 = vdwg.mxu0
    %v300 = vld [vmem:[%s1] sm:$0xff]
    %v301 = vld [vmem:[%s8] sm:$0xff]
    %v302 = vld [vmem:[%s8 + $0x8] sm:$0x3]
    %v303 = vld [vmem:[%s9] sm:$0x1]
    %v305 = vlaneseq
    %v306 = vshrl.u32 %v305, 7
    %v307 = vsub.s32 0, %v306
    %v308 = vrot.slane %v303, %v307
    %vm310 = vcmask 80896
    %v312 = vsel %vm310, %v300, 0
    %vm314 = vcmask 1041408
    %v316 = vsel %vm314, %v302, 0
    %318 = vmatprep.subr.mxu0 0.0
    %319 = vmatpush1.msra.mxu0 0.0
    %320 = vmatprep.subr.mxu0 0.0
    %321 = vmatpush1.msra.mxu0 0.0
    %322 = vmatprep.subr.mxu0 0.0
    %323 = vmatpush1.msra.mxu0 0.0
    %324 = vmatprep.subr.mxu0 0.0
    %325 = vmatpush1.msra.mxu0 0.0
    %326 = vmatprep.subr.mxu0 0.0
    %327 = vmatpush1.msra.mxu0 0.0
    %328 = vmatprep.subr.mxu0 0.0
    %329 = vmatpush1.msra.mxu0 0.0
    %330 = vmatprep.subr.mxu0 0.0
    %331 = vmatpush1.msra.mxu0 0.0
    %332 = vmatprep.subr.mxu0 0.0
    %333 = vmatpush1.msra.mxu0 0.0
    %334 = vmatprep.subr.mxu0 0.0
    %335 = vmatpush1.msra.mxu0 0.0
    %336 = vmatprep.subr.mxu0 0.0
    %337 = vmatpush1.msra.mxu0 0.0
    %338 = vmatprep.subr.mxu0 0.0
    %339 = vmatpush1.msra.mxu0 0.0
    %340 = vmatprep.subr.mxu0 0.0
    %341 = vmatpush1.msra.mxu0 0.0
    %342 = vmatprep.subr.mxu0 0.0
    %343 = vmatpush1.msra.mxu0 0.0
    %344 = vmatprep.subr.mxu0 0.0
    %345 = vmatpush1.msra.mxu0 0.0
    %346 = vmatprep.subr.mxu0 0.0
    %347 = vmatpush1.msra.mxu0 %v316
    %348 = vmatprep.subr.mxu0 0.0
    %349 = vmatpush1.msra.mxu0 %v301
    %350 = vmatprep.subr.mxu0 0.0
    %351 = vmatpush2.msra.mxu0 0.0
    %352 = vmatprep.subr.mxu0 0.0
    %353 = vmatpush2.msra.mxu0 0.0
    %354 = vmatprep.subr.mxu0 0.0
    %355 = vmatpush2.msra.mxu0 0.0
    %356 = vmatprep.subr.mxu0 0.0
    %357 = vmatpush2.msra.mxu0 0.0
    %358 = vmatprep.subr.mxu0 0.0
    %359 = vmatpush2.msra.mxu0 0.0
    %360 = vmatprep.subr.mxu0 0.0
    %361 = vmatpush2.msra.mxu0 0.0
    %362 = vmatprep.subr.mxu0 0.0
    %363 = vmatpush2.msra.mxu0 0.0
    %364 = vmatprep.subr.mxu0 0.0
    %365 = vmatpush2.msra.mxu0 0.0
    %366 = vmatprep.subr.mxu0 0.0
    %367 = vmatpush2.msra.mxu0 0.0
    %368 = vmatprep.subr.mxu0 0.0
    %369 = vmatpush2.msra.mxu0 0.0
    %370 = vmatprep.subr.mxu0 0.0
    %371 = vmatpush2.msra.mxu0 0.0
    %372 = vmatprep.subr.mxu0 0.0
    %373 = vmatpush2.msra.mxu0 0.0
    %374 = vmatprep.subr.mxu0 0.0
    %375 = vmatpush2.msra.mxu0 0.0
    %376 = vmatprep.subr.mxu0 0.0
    %377 = vmatpush2.msra.mxu0 0.0
    %378 = vmatprep.subr.mxu0 0.0
    %379 = vmatpush2.msra.mxu0 0.0
    %380 = vmatprep.subr.mxu0 0.0
    %381 = vmatpush2.msra.mxu0 0.0
    %382 = vmatprep.mubr.f32.mxu0 0.0
    %383 = vmatmul.mubr.f32.gmra.mxu0 %v312
    %v384 = vpop.f32.mrf.mxu0
    %v385 = vadd.f32 %v308, %v384
    %v386 = vpop.f32.mrf.mxu0
    %387 = vdwg.mxu0
    %v388 = vmax.f32 %v385, 0.0
    %v389 = vld [vmem:[%s10] sm:$0xff]
    %v390 = vld [vmem:[%s10 + $0x8] sm:$0xff]
    %v391 = vld [vmem:[%s10 + $0x10] sm:$0xff]
    %v392 = vld [vmem:[%s10 + $0x18] sm:$0xff]
    %v393 = vld [vmem:[%s11] sm:$0x1]
    %v395 = vlaneseq
    %v396 = vshrl.u32 %v395, 7
    %v397 = vsub.s32 0, %v396
    %v398 = vrot.slane %v393, %v397
    %v401 = vsel %vm141, %v388, 0
    %403 = vmatprep.subr.mxu0 0.0
    %404 = vmatpush1.msra.mxu0 0.0
    %405 = vmatprep.subr.mxu0 0.0
    %406 = vmatpush1.msra.mxu0 0.0
    %407 = vmatprep.subr.mxu0 0.0
    %408 = vmatpush1.msra.mxu0 0.0
    %409 = vmatprep.subr.mxu0 0.0
    %410 = vmatpush1.msra.mxu0 0.0
    %411 = vmatprep.subr.mxu0 0.0
    %412 = vmatpush1.msra.mxu0 0.0
    %413 = vmatprep.subr.mxu0 0.0
    %414 = vmatpush1.msra.mxu0 0.0
    %415 = vmatprep.subr.mxu0 0.0
    %416 = vmatpush1.msra.mxu0 0.0
    %417 = vmatprep.subr.mxu0 0.0
    %418 = vmatpush1.msra.mxu0 0.0
    %419 = vmatprep.subr.mxu0 0.0
    %420 = vmatpush1.msra.mxu0 0.0
    %421 = vmatprep.subr.mxu0 0.0
    %422 = vmatpush1.msra.mxu0 0.0
    %423 = vmatprep.subr.mxu0 0.0
    %424 = vmatpush1.msra.mxu0 0.0
    %425 = vmatprep.subr.mxu0 0.0
    %426 = vmatpush1.msra.mxu0 0.0
    %427 = vmatprep.subr.mxu0 0.0
    %428 = vmatpush1.msra.mxu0 %v392
    %429 = vmatprep.subr.mxu0 0.0
    %430 = vmatpush1.msra.mxu0 %v391
    %431 = vmatprep.subr.mxu0 0.0
    %432 = vmatpush1.msra.mxu0 %v390
    %433 = vmatprep.subr.mxu0 0.0
    %434 = vmatpush1.msra.mxu0 %v389
    %435 = vmatprep.subr.mxu0 0.0
    %436 = vmatpush2.msra.mxu0 0.0
    %437 = vmatprep.subr.mxu0 0.0
    %438 = vmatpush2.msra.mxu0 0.0
    %439 = vmatprep.subr.mxu0 0.0
    %440 = vmatpush2.msra.mxu0 0.0
    %441 = vmatprep.subr.mxu0 0.0
    %442 = vmatpush2.msra.mxu0 0.0
    %443 = vmatprep.subr.mxu0 0.0
    %444 = vmatpush2.msra.mxu0 0.0
    %445 = vmatprep.subr.mxu0 0.0
    %446 = vmatpush2.msra.mxu0 0.0
    %447 = vmatprep.subr.mxu0 0.0
    %448 = vmatpush2.msra.mxu0 0.0
    %449 = vmatprep.subr.mxu0 0.0
    %450 = vmatpush2.msra.mxu0 0.0
    %451 = vmatprep.subr.mxu0 0.0
    %452 = vmatpush2.msra.mxu0 0.0
    %453 = vmatprep.subr.mxu0 0.0
    %454 = vmatpush2.msra.mxu0 0.0
    %455 = vmatprep.subr.mxu0 0.0
    %456 = vmatpush2.msra.mxu0 0.0
    %457 = vmatprep.subr.mxu0 0.0
    %458 = vmatpush2.msra.mxu0 0.0
    %459 = vmatprep.subr.mxu0 0.0
    %460 = vmatpush2.msra.mxu0 0.0
    %461 = vmatprep.subr.mxu0 0.0
    %462 = vmatpush2.msra.mxu0 0.0
    %463 = vmatprep.subr.mxu0 0.0
    %464 = vmatpush2.msra.mxu0 0.0
    %465 = vmatprep.subr.mxu0 0.0
    %466 = vmatpush2.msra.mxu0 0.0
    %467 = vmatprep.mubr.f32.mxu0 0.0
    %468 = vmatmul.mubr.f32.gmra.mxu0 %v401
    %v469 = vpop.f32.mrf.mxu0
    %v470 = vadd.f32 %v398, %v469
    %v471 = vpop.f32.mrf.mxu0
    %472 = vdwg.mxu0
    %v473 = vmul.f32 %v297, %v470
    %vm474 = vcmask 130048
    %v475 = vsel %vm474, %v473, 0.0
    %476 = vadd.xlane.f32.xlu0 %v475
    %v477 = vpop.xlane.xlu0 %476
    %v478 = vrot.slane %v477, 4
    %v479 = vadd.f32 %v477, %v478
    %v480 = vrot.slane %v479, 2
    %v481 = vadd.f32 %v479, %v480
    %v482 = vrot.slane %v481, 1
    %v483 = vadd.f32 %v481, %v482
    %s484 = vtos %v483
    %v485 = vrcp.pop 8.0
    %s486 = vtos %v485
    %s487 = smul.f32 %s484, %s486
    %v489 = vsel %vm474, %v297, 0
    %v492 = vsel %vm474, %v470, 0
    %494 = vmatprep.subr.mxu0 0.0
    %495 = vmatpush1.xpose.msra.mxu0 0.0
    %496 = vmatprep.subr.mxu0 0.0
    %497 = vmatpush1.xpose.msra.mxu0 0.0
    %498 = vmatprep.subr.mxu0 0.0
    %499 = vmatpush1.xpose.msra.mxu0 0.0
    %500 = vmatprep.subr.mxu0 0.0
    %501 = vmatpush1.xpose.msra.mxu0 0.0
    %502 = vmatprep.subr.mxu0 0.0
    %503 = vmatpush1.xpose.msra.mxu0 0.0
    %504 = vmatprep.subr.mxu0 0.0
    %505 = vmatpush1.xpose.msra.mxu0 0.0
    %506 = vmatprep.subr.mxu0 0.0
    %507 = vmatpush1.xpose.msra.mxu0 0.0
    %508 = vmatprep.subr.mxu0 0.0
    %509 = vmatpush1.xpose.msra.mxu0 0.0
    %510 = vmatprep.subr.mxu0 0.0
    %511 = vmatpush1.xpose.msra.mxu0 0.0
    %512 = vmatprep.subr.mxu0 0.0
    %513 = vmatpush1.xpose.msra.mxu0 0.0
    %514 = vmatprep.subr.mxu0 0.0
    %515 = vmatpush1.xpose.msra.mxu0 0.0
    %516 = vmatprep.subr.mxu0 0.0
    %517 = vmatpush1.xpose.msra.mxu0 0.0
    %518 = vmatprep.subr.mxu0 0.0
    %519 = vmatpush1.xpose.msra.mxu0 0.0
    %520 = vmatprep.subr.mxu0 0.0
    %521 = vmatpush1.xpose.msra.mxu0 0.0
    %522 = vmatprep.subr.mxu0 0.0
    %523 = vmatpush1.xpose.msra.mxu0 0.0
    %524 = vmatprep.subr.mxu0 0.0
    %525 = vmatpush1.xpose.msra.mxu0 %v492
    %526 = vmatprep.subr.mxu0 0.0
    %527 = vmatpush2.xpose.msra.mxu0 0.0
    %528 = vmatprep.subr.mxu0 0.0
    %529 = vmatpush2.xpose.msra.mxu0 0.0
    %530 = vmatprep.subr.mxu0 0.0
    %531 = vmatpush2.xpose.msra.mxu0 0.0
    %532 = vmatprep.subr.mxu0 0.0
    %533 = vmatpush2.xpose.msra.mxu0 0.0
    %534 = vmatprep.subr.mxu0 0.0
    %535 = vmatpush2.xpose.msra.mxu0 0.0
    %536 = vmatprep.subr.mxu0 0.0
    %537 = vmatpush2.xpose.msra.mxu0 0.0
    %538 = vmatprep.subr.mxu0 0.0
    %539 = vmatpush2.xpose.msra.mxu0 0.0
    %540 = vmatprep.subr.mxu0 0.0
    %541 = vmatpush2.xpose.msra.mxu0 0.0
    %542 = vmatprep.subr.mxu0 0.0
    %543 = vmatpush2.xpose.msra.mxu0 0.0
    %544 = vmatprep.subr.mxu0 0.0
    %545 = vmatpush2.xpose.msra.mxu0 0.0
    %546 = vmatprep.subr.mxu0 0.0
    %547 = vmatpush2.xpose.msra.mxu0 0.0
    %548 = vmatprep.subr.mxu0 0.0
    %549 = vmatpush2.xpose.msra.mxu0 0.0
    %550 = vmatprep.subr.mxu0 0.0
    %551 = vmatpush2.xpose.msra.mxu0 0.0
    %552 = vmatprep.subr.mxu0 0.0
    %553 = vmatpush2.xpose.msra.mxu0 0.0
    %554 = vmatprep.subr.mxu0 0.0
    %555 = vmatpush2.xpose.msra.mxu0 0.0
    %556 = vmatprep.subr.mxu0 0.0
    %557 = vmatpush2.xpose.msra.mxu0 0.0
    %558 = vmatprep.mubr.f32.mxu0 0.0
    %559 = vmatmul.mubr.f32.gmra.mxu0 %v489
    %v560 = vpop.f32.mrf.mxu0
    %v561 = vadd.f32 0.0, %v560
    %v562 = vpop.f32.mrf.mxu0
    %563 = vdwg.mxu0
    %v564 = vmax.f32 %v561, -5.0
    %v565 = vmin.f32 %v564, 5.0
    %v566 = vlaneseq
    %v567 = vshrl.u32 %v566, 7
    %v568 = vlaneseq
    %v569 = vand.u32 %v568, 127
    %vm570 = vcmp.eq.s32.totalorder %v567, %v569
    %v571 = vsel %vm570, -1e+30, %v565
    %vm572 = vcmask 64512
    %v573 = vsel %vm572, %v571, -inf
    %574 = vmax.xlane.f32.xlu0 %v573
    %v575 = vpop.xlane.xlu0 %574
    %v576 = vrot.slane %v575, 4
    %v577 = vmax.f32 %v575, %v576
    %v578 = vrot.slane %v577, 2
    %v579 = vmax.f32 %v577, %v578
    %v580 = vrot.slane %v579, 1
    %v581 = vmax.f32 %v579, %v580
    %s582 = vtos %v581
    %v583 = vstv %s582
    %v584 = vsub.f32 %v571, %v583
    %v585 = vmul.f32 %v584, 1.442695
    %v586 = vpow.pop %v585
    %v587 = vsel %vm572, %v586, 0.0
    %588 = vadd.xlane.f32.xlu0 %v587
    %v589 = vpop.xlane.xlu0 %588
    %v590 = vrot.slane %v589, 4
    %v591 = vadd.f32 %v589, %v590
    %v592 = vrot.slane %v591, 2
    %v593 = vadd.f32 %v591, %v592
    %v594 = vrot.slane %v593, 1
    %v595 = vadd.f32 %v593, %v594
    %s596 = vtos %v595
    %v597 = vstv %s596
    %v598 = vlog2.pop %v597
    %v599 = vmul.f32 %v598, 0.6931472
    %s600 = vtos %v599
    %s601 = sadd.f32 %s582, %s600
    %s602 = ssub.f32 %s601, 4.0253515
    %s603 = ssub.f32 %s487, %s602
    %s604 = scalar_lea.smem [#allocation2], 0
    %605 = sst [smem:[%s604]] %s603
    // Predicated region
    $region50: #{tpu_custom_call.1} parent=1 // pred_check
      _
    $region51: #{tpu_custom_call.1} parent=1 // pred_check_branch
      %607 = sbr.rel (0) target = $region53
    $region52: #{tpu_custom_call.1} parent=1 // pred_region
      %s609 = ssub.s32 16, 16
      %610 = vsyncadd [#allocation3], %s609
      %613 = dma.smem_to_hbm [#allocation2], 16, %s12, [#allocation3]
    $region53: #{tpu_custom_call.1} parent=1 // pred_fallthru
      _
    // Predicated region
    $region54: #{tpu_custom_call.1} parent=1 // pred_check
      _
    $region55: #{tpu_custom_call.1} parent=1 // pred_check_branch
      %615 = sbr.rel (0) target = $region57
    $region56: #{tpu_custom_call.1} parent=1 // pred_region
      %616 = dma.done [#allocation3], 16
    $region57: #{tpu_custom_call.1} parent=1 // pred_fallthru
      _
    %617 = sfence
    %618 = vsyncpa [#allocation3], 1

</llo_original>
